<compile_context>
chip_gen: v5e
topology: v5e:2x2
jax: 0.10.0
libtpu: 0.0.40
codegen_flags: <defaults>
</compile_context>

<pallas_src>
import functools

import jax
import jax.numpy as jnp
from jax import lax
from jax.experimental import pallas as pl
from jax.experimental.pallas import tpu as pltpu


# ----------------------------------------------------------------------------
# Fast path: stride == 1, odd kernel ("same" conv). Fully fused DBR forward.
# ----------------------------------------------------------------------------
def dbr_flat_kernel(x_ref, dw_ref, pw_ref, gamma_ref, beta_ref, o_ref,
                    *, N, W, HW, k, p, eps):
    # x_ref     : (N, Cin_p, L) VMEM   flattened H-padded input (+p guard lanes)
    # dw_ref    : (Cin_p, k*k)  VMEM   depthwise weights, tap-major columns
    # pw_ref    : (Cout, Cin_p) VMEM   pointwise 1x1 weights
    # gamma_ref : (Cout, 1)     VMEM   BN gamma
    # beta_ref  : (Cout, 1)     VMEM   BN beta
    # o_ref     : (N, Cout, HW) VMEM   output (lane-dense flattened spatial)

    # Lane index -> output column wo (period W). Masks zero the lanes whose
    # kj-shift wrapped across a row boundary; built once, reused for every n.
    wo = lax.broadcasted_iota(jnp.int32, (1, HW), 1) % W
    masks = []
    for kj in range(k):
        if kj < p:
            masks.append(wo >= (p - kj))
        elif kj > p:
            masks.append(wo < (W - (kj - p)))
        else:
            masks.append(None)
    # Per-tap (Cin_p, 1) weight columns, hoisted out of the batch loop.
    wcols = [dw_ref[:, t:t + 1] for t in range(k * k)]
    pw = pw_ref[...]

    ys = []
    sum_c = None
    sq_c = None
    for n in range(N):
        # Depthwise conv: k*k lane-shifted taps, channel-vectorized (VPU+XLU).
        acc = None
        for ki in range(k):
            for kj in range(k):
                t = ki * k + kj
                tap = x_ref[n, :, pl.ds(ki * W + kj, HW)] * wcols[t]
                if masks[kj] is not None:          # zero row-wrapped lanes
                    tap = jnp.where(masks[kj], tap, 0.0)
                acc = tap if acc is None else acc + tap
        # Pointwise 1x1 conv on the MXU (channels already on sublanes/lanes).
        # The conv bias is intentionally omitted: training-mode BN subtracts
        # the batch mean, which cancels a per-channel additive bias exactly.
        y = jnp.dot(pw, acc, preferred_element_type=jnp.float32,
                    precision=lax.Precision.HIGHEST)          # (Cout, HW)
        ys.append(y)
        s = jnp.sum(y, axis=1, keepdims=True)                 # (Cout, 1)
        q = jnp.sum(y * y, axis=1, keepdims=True)
        sum_c = s if sum_c is None else sum_c + s
        sq_c = q if sq_c is None else sq_c + q

    # Training-mode BN folded into per-channel scale/shift (tiny (Cout,1) math).
    inv_cnt = 1.0 / float(N * HW)
    mean = sum_c * inv_cnt
    var = jnp.maximum(sq_c * inv_cnt - mean * mean, 0.0)
    scale = gamma_ref[...] * lax.rsqrt(var + eps)
    shift = beta_ref[...] - mean * scale
    for n in range(N):
        o_ref[n] = jnp.maximum(ys[n] * scale + shift, 0.0)


# ----------------------------------------------------------------------------
# General fallback (stride > 1 or even kernel): correct, not perf-tuned.
# ----------------------------------------------------------------------------
def dbr_general_kernel(x_ref, dw_ref, pw_ref, gamma_ref, beta_ref, o_ref,
                       *, N, Cin, Cout, k, stride, Ho, Wo, eps):
    # x_ref (N, Cin, Hp, Wp) VMEM; dw_ref (Cin*k*k,) SMEM; pw_ref (Cout*Cin,)
    # SMEM; gamma_ref/beta_ref (Cout,) SMEM; o_ref (N, Cout, Ho, Wo) VMEM.
    # TODO(synk): for stride>1, hoist the W-decimation out of the k*k tap loop
    # (per-tap strided lane loads are relayout-heavy); fallback path only.
    ys = {}
    sums = [None] * Cout
    sqs = [None] * Cout
    for n in range(N):
        dw_out = []
        for ci in range(Cin):
            acc = None
            for ki in range(k):
                for kj in range(k):
                    w = dw_ref[ci * k * k + ki * k + kj]          # SMEM scalar
                    patch = x_ref[n, ci, pl.ds(ki, Ho, stride),
                                  pl.ds(kj, Wo, stride)]
                    term = patch * w
                    acc = term if acc is None else acc + term
            dw_out.append(acc)                                    # (Ho, Wo)
        for co in range(Cout):
            y = None
            for ci in range(Cin):
                term = dw_out[ci] * pw_ref[co * Cin + ci]
                y = term if y is None else y + term
            ys[(n, co)] = y
            s = jnp.sum(y, keepdims=True)                         # (1, 1)
            q = jnp.sum(y * y, keepdims=True)
            sums[co] = s if sums[co] is None else sums[co] + s
            sqs[co] = q if sqs[co] is None else sqs[co] + q

    inv_cnt = 1.0 / float(N * Ho * Wo)
    for co in range(Cout):
        mean = sums[co] * inv_cnt
        var = jnp.maximum(sqs[co] * inv_cnt - mean * mean, 0.0)
        scale = gamma_ref[co] * lax.rsqrt(var + eps)
        shift = beta_ref[co] - mean * scale
        for n in range(N):
            o_ref[n, co] = jnp.maximum(ys[(n, co)] * scale + shift, 0.0)


# ----------------------------------------------------------------------------
# Wrapper
# ----------------------------------------------------------------------------
def dbr_forward(x_nchw, dw_w, pw_w, pw_b, bn_gamma, bn_beta,
                *, kernel, stride, eps=1e-5):
    """x_nchw: (N, Cin, H, W). dw_w: (Cin,1,k,k). pw_w: (Cout,Cin,1,1).
    Returns (N, Cout, Ho, Wo) in NCHW, matching the PyTorch DBR forward."""
    N, Cin, H, W = x_nchw.shape
    Cout = pw_w.shape[0]
    k, s = kernel, stride
    p = k // 2
    Ho = (H + 2 * p - k) // s + 1
    Wo = (W + 2 * p - k) // s + 1

    x = x_nchw.astype(jnp.float32)
    dwf = dw_w[:, 0, :, :].astype(jnp.float32)               # (Cin, k, k)
    pwf = pw_w[:, :, 0, 0].astype(jnp.float32)               # (Cout, Cin)
    g = bn_gamma.astype(jnp.float32)
    b = bn_beta.astype(jnp.float32)
    del pw_b   # cancelled exactly by the training-mode BN mean subtraction

    cparams = pltpu.CompilerParams(vmem_limit_bytes=64 * 1024 * 1024)
    vmem = pl.BlockSpec(memory_space=pltpu.MemorySpace.VMEM)
    smem = pl.BlockSpec(memory_space=pltpu.MemorySpace.SMEM)

    fast = (s == 1) and (2 * p == k - 1)      # stride 1, odd k ("same" conv)
    if fast:
        # Channel pad to a sublane multiple: free at these sizes (same vreg
        # tiles touched) and keeps the MXU pointwise operands tile-friendly.
        Cin_p = -(-Cin // 8) * 8
        Hp = H + 2 * p
        HW = Ho * Wo                                          # == H * W here
        xq = jnp.pad(x, ((0, 0), (0, Cin_p - Cin), (p, p), (0, 0)))
        # Flatten spatial per channel and add p guard zeros at both ends so
        # every tap shift ki*W+kj (0 .. (k-1)*(W+1)) is an in-bounds lane slice.
        xf = jnp.pad(xq.reshape(N, Cin_p, Hp * W), ((0, 0), (0, 0), (p, p)))
        dwt = jnp.pad(dwf.reshape(Cin, k * k), ((0, Cin_p - Cin), (0, 0)))
        pwt = jnp.pad(pwf, ((0, 0), (0, Cin_p - Cin)))
        out = pl.pallas_call(
            functools.partial(dbr_flat_kernel, N=N, W=W, HW=HW, k=k, p=p,
                              eps=eps),
            out_shape=jax.ShapeDtypeStruct((N, Cout, HW), jnp.float32),
            in_specs=[vmem, vmem, vmem, vmem, vmem],
            out_specs=vmem,
            compiler_params=cparams,
        )(xf, dwt, pwt, g.reshape(Cout, 1), b.reshape(Cout, 1))
        return out.reshape(N, Cout, Ho, Wo)

    # General fallback: pad both spatial dims, keep NCHW 2D tiles per channel.
    xp = jnp.pad(x, ((0, 0), (0, 0), (p, p), (p, p)))
    out = pl.pallas_call(
        functools.partial(dbr_general_kernel, N=N, Cin=Cin, Cout=Cout, k=k,
                          stride=s, Ho=Ho, Wo=Wo, eps=eps),
        out_shape=jax.ShapeDtypeStruct((N, Cout, Ho, Wo), jnp.float32),
        in_specs=[vmem, smem, smem, smem, smem],
        out_specs=vmem,
        compiler_params=cparams,
    )(xp, dwf.reshape(Cin * k * k), pwf.reshape(Cout * Cin), g, b)
    return out


# ----------------------------------------------------------------------------
# Pure-JAX reference (silent correctness check against the PyTorch semantics).
# ----------------------------------------------------------------------------
def dbr_reference(x, dw_w, pw_w, pw_b, gamma, beta, *, kernel, stride, eps=1e-5):
    Cin = x.shape[1]
    p = kernel // 2
    dn = ("NCHW", "OIHW", "NCHW")
    y = lax.conv_general_dilated(x, dw_w, (stride, stride), [(p, p), (p, p)],
                                 dimension_numbers=dn, feature_group_count=Cin,
                                 precision=lax.Precision.HIGHEST)
    y = lax.conv_general_dilated(y, pw_w, (1, 1), [(0, 0), (0, 0)],
                                 dimension_numbers=dn,
                                 precision=lax.Precision.HIGHEST)
    y = y + pw_b[None, :, None, None]
    mean = y.mean(axis=(0, 2, 3))
    var = y.var(axis=(0, 2, 3))
    yn = (y - mean[None, :, None, None]) * lax.rsqrt(var + eps)[None, :, None, None]
    return jnp.maximum(gamma[None, :, None, None] * yn + beta[None, :, None, None], 0.0)


if __name__ == "__main__":
    N, Cin, H, W = 2, 4, 16, 16
    Cout, kernel, stride = 8, 3, 1

    key = jax.random.PRNGKey(0)
    kx, kdw, kpw, kpb = jax.random.split(key, 4)
    x = jax.random.normal(kx, (N, Cin, H, W), jnp.float32)
    dw_w = jax.random.normal(kdw, (Cin, 1, kernel, kernel), jnp.float32) * 0.2
    pw_w = jax.random.normal(kpw, (Cout, Cin, 1, 1), jnp.float32) * 0.2
    pw_b = jax.random.normal(kpb, (Cout,), jnp.float32) * 0.1
    bn_gamma = jnp.ones((Cout,), jnp.float32)    # PyTorch BatchNorm2d defaults
    bn_beta = jnp.zeros((Cout,), jnp.float32)

    out = dbr_forward(x, dw_w, pw_w, pw_b, bn_gamma, bn_beta,
                      kernel=kernel, stride=stride)
    out = jax.block_until_ready(out)

    ref = dbr_reference(x, dw_w, pw_w, pw_b, bn_gamma, bn_beta,
                        kernel=kernel, stride=stride)
    assert out.shape == (N, Cout, H, W), out.shape
    err = float(jnp.max(jnp.abs(out - ref)))
    assert jnp.allclose(out, ref, atol=2e-3, rtol=2e-3), err

    print("KERNEL_OK")
</pallas_src>

<mosaic_0001>
module attributes {stable_mosaic.version = 11 : i64} {
  func.func @dbr_flat_kernel(%arg0: memref<2x8x290xf32, #tpu.memory_space<vmem>>, %arg1: memref<8x9xf32, #tpu.memory_space<vmem>>, %arg2: memref<8x8xf32, #tpu.memory_space<vmem>>, %arg3: memref<8x1xf32, #tpu.memory_space<vmem>>, %arg4: memref<8x1xf32, #tpu.memory_space<vmem>>, %arg5: memref<2x8x256xf32, #tpu.memory_space<vmem>>) attributes {dimension_semantics = [], scalar_prefetch = 0 : i64, scratch_operands = 0 : i64, tpu.core_type = #tpu.core_type<tc>} {
    %0 = tpu.iota {dimensions = array<i32: 1>} : vector<1x256xi32>
    %c16_i32 = arith.constant 16 : i32
    %c0_i32 = arith.constant 0 : i32
    %1 = arith.cmpi eq, %c16_i32, %c0_i32 : i32
    %c1_i32 = arith.constant 1 : i32
    %2 = arith.select %1, %c1_i32, %c16_i32 : i32
    %3 = vector.broadcast %2 : i32 to vector<1x256xi32>
    %4 = arith.remsi %0, %3 : vector<1x256xi32>
    %c0_i32_0 = arith.constant 0 : i32
    %5 = vector.broadcast %c0_i32_0 : i32 to vector<1x256xi32>
    %6 = arith.cmpi ne, %4, %5 : vector<1x256xi32>
    %c0_i32_1 = arith.constant 0 : i32
    %7 = vector.broadcast %c0_i32_1 : i32 to vector<1x256xi32>
    %8 = arith.cmpi slt, %4, %7 : vector<1x256xi32>
    %c0_i32_2 = arith.constant 0 : i32
    %9 = arith.cmpi slt, %2, %c0_i32_2 : i32
    %10 = vector.broadcast %9 : i1 to vector<1x256xi1>
    %11 = vector.broadcast %10 : vector<1x256xi1> to vector<1x256xi1>
    %12 = arith.xori %8, %11 : vector<1x256xi1>
    %13 = arith.andi %12, %6 : vector<1x256xi1>
    %14 = vector.broadcast %2 : i32 to vector<1x256xi32>
    %15 = arith.addi %4, %14 : vector<1x256xi32>
    %16 = arith.select %13, %15, %4 : vector<1x256xi1>, vector<1x256xi32>
    %c1_i32_3 = arith.constant 1 : i32
    %17 = vector.broadcast %c1_i32_3 : i32 to vector<1x256xi32>
    %18 = arith.cmpi sge, %16, %17 : vector<1x256xi32>
    %c15_i32 = arith.constant 15 : i32
    %19 = vector.broadcast %c15_i32 : i32 to vector<1x256xi32>
    %20 = arith.cmpi slt, %16, %19 : vector<1x256xi32>
    %c0 = arith.constant 0 : index
    %c0_4 = arith.constant 0 : index
    %21 = vector.load %arg1[%c0, %c0_4] : memref<8x9xf32, #tpu.memory_space<vmem>>, vector<8x1xf32>
    %c0_5 = arith.constant 0 : index
    %c1 = arith.constant 1 : index
    %22 = vector.load %arg1[%c0_5, %c1] : memref<8x9xf32, #tpu.memory_space<vmem>>, vector<8x1xf32>
    %c0_6 = arith.constant 0 : index
    %c2 = arith.constant 2 : index
    %23 = vector.load %arg1[%c0_6, %c2] : memref<8x9xf32, #tpu.memory_space<vmem>>, vector<8x1xf32>
    %c0_7 = arith.constant 0 : index
    %c3 = arith.constant 3 : index
    %24 = vector.load %arg1[%c0_7, %c3] : memref<8x9xf32, #tpu.memory_space<vmem>>, vector<8x1xf32>
    %c0_8 = arith.constant 0 : index
    %c4 = arith.constant 4 : index
    %25 = vector.load %arg1[%c0_8, %c4] : memref<8x9xf32, #tpu.memory_space<vmem>>, vector<8x1xf32>
    %c0_9 = arith.constant 0 : index
    %c5 = arith.constant 5 : index
    %26 = vector.load %arg1[%c0_9, %c5] : memref<8x9xf32, #tpu.memory_space<vmem>>, vector<8x1xf32>
    %c0_10 = arith.constant 0 : index
    %c6 = arith.constant 6 : index
    %27 = vector.load %arg1[%c0_10, %c6] : memref<8x9xf32, #tpu.memory_space<vmem>>, vector<8x1xf32>
    %c0_11 = arith.constant 0 : index
    %c7 = arith.constant 7 : index
    %28 = vector.load %arg1[%c0_11, %c7] : memref<8x9xf32, #tpu.memory_space<vmem>>, vector<8x1xf32>
    %c0_12 = arith.constant 0 : index
    %c8 = arith.constant 8 : index
    %29 = vector.load %arg1[%c0_12, %c8] : memref<8x9xf32, #tpu.memory_space<vmem>>, vector<8x1xf32>
    %c0_13 = arith.constant 0 : index
    %c0_14 = arith.constant 0 : index
    %30 = vector.load %arg2[%c0_13, %c0_14] : memref<8x8xf32, #tpu.memory_space<vmem>>, vector<8x8xf32>
    %c0_15 = arith.constant 0 : index
    %c0_16 = arith.constant 0 : index
    %c0_17 = arith.constant 0 : index
    %31 = vector.load %arg0[%c0_15, %c0_16, %c0_17] : memref<2x8x290xf32, #tpu.memory_space<vmem>>, vector<1x8x256xf32>
    %32 = vector.shape_cast %31 : vector<1x8x256xf32> to vector<8x256xf32>
    %33 = vector.broadcast %21 : vector<8x1xf32> to vector<8x256xf32>
    %34 = arith.mulf %32, %33 : vector<8x256xf32>
    %cst = arith.constant 0.000000e+00 : f32
    %35 = vector.shape_cast %18 : vector<1x256xi1> to vector<1x256xi1>
    %36 = vector.broadcast %35 : vector<1x256xi1> to vector<8x256xi1>
    %37 = vector.broadcast %cst : f32 to vector<8x256xf32>
    %38 = arith.select %36, %34, %37 : vector<8x256xi1>, vector<8x256xf32>
    %c0_18 = arith.constant 0 : index
    %c0_19 = arith.constant 0 : index
    %c1_20 = arith.constant 1 : index
    %39 = vector.load %arg0[%c0_18, %c0_19, %c1_20] : memref<2x8x290xf32, #tpu.memory_space<vmem>>, vector<1x8x256xf32>
    %40 = vector.shape_cast %39 : vector<1x8x256xf32> to vector<8x256xf32>
    %41 = vector.broadcast %22 : vector<8x1xf32> to vector<8x256xf32>
    %42 = arith.mulf %40, %41 : vector<8x256xf32>
    %43 = arith.addf %38, %42 : vector<8x256xf32>
    %c0_21 = arith.constant 0 : index
    %c0_22 = arith.constant 0 : index
    %c2_23 = arith.constant 2 : index
    %44 = vector.load %arg0[%c0_21, %c0_22, %c2_23] : memref<2x8x290xf32, #tpu.memory_space<vmem>>, vector<1x8x256xf32>
    %45 = vector.shape_cast %44 : vector<1x8x256xf32> to vector<8x256xf32>
    %46 = vector.broadcast %23 : vector<8x1xf32> to vector<8x256xf32>
    %47 = arith.mulf %45, %46 : vector<8x256xf32>
    %cst_24 = arith.constant 0.000000e+00 : f32
    %48 = vector.shape_cast %20 : vector<1x256xi1> to vector<1x256xi1>
    %49 = vector.broadcast %48 : vector<1x256xi1> to vector<8x256xi1>
    %50 = vector.broadcast %cst_24 : f32 to vector<8x256xf32>
    %51 = arith.select %49, %47, %50 : vector<8x256xi1>, vector<8x256xf32>
    %52 = arith.addf %43, %51 : vector<8x256xf32>
    %c0_25 = arith.constant 0 : index
    %c0_26 = arith.constant 0 : index
    %c16 = arith.constant 16 : index
    %53 = vector.load %arg0[%c0_25, %c0_26, %c16] : memref<2x8x290xf32, #tpu.memory_space<vmem>>, vector<1x8x256xf32>
    %54 = vector.shape_cast %53 : vector<1x8x256xf32> to vector<8x256xf32>
    %55 = vector.broadcast %24 : vector<8x1xf32> to vector<8x256xf32>
    %56 = arith.mulf %54, %55 : vector<8x256xf32>
    %cst_27 = arith.constant 0.000000e+00 : f32
    %57 = vector.shape_cast %18 : vector<1x256xi1> to vector<1x256xi1>
    %58 = vector.broadcast %57 : vector<1x256xi1> to vector<8x256xi1>
    %59 = vector.broadcast %cst_27 : f32 to vector<8x256xf32>
    %60 = arith.select %58, %56, %59 : vector<8x256xi1>, vector<8x256xf32>
    %61 = arith.addf %52, %60 : vector<8x256xf32>
    %c0_28 = arith.constant 0 : index
    %c0_29 = arith.constant 0 : index
    %c17 = arith.constant 17 : index
    %62 = vector.load %arg0[%c0_28, %c0_29, %c17] : memref<2x8x290xf32, #tpu.memory_space<vmem>>, vector<1x8x256xf32>
    %63 = vector.shape_cast %62 : vector<1x8x256xf32> to vector<8x256xf32>
    %64 = vector.broadcast %25 : vector<8x1xf32> to vector<8x256xf32>
    %65 = arith.mulf %63, %64 : vector<8x256xf32>
    %66 = arith.addf %61, %65 : vector<8x256xf32>
    %c0_30 = arith.constant 0 : index
    %c0_31 = arith.constant 0 : index
    %c18 = arith.constant 18 : index
    %67 = vector.load %arg0[%c0_30, %c0_31, %c18] : memref<2x8x290xf32, #tpu.memory_space<vmem>>, vector<1x8x256xf32>
    %68 = vector.shape_cast %67 : vector<1x8x256xf32> to vector<8x256xf32>
    %69 = vector.broadcast %26 : vector<8x1xf32> to vector<8x256xf32>
    %70 = arith.mulf %68, %69 : vector<8x256xf32>
    %cst_32 = arith.constant 0.000000e+00 : f32
    %71 = vector.shape_cast %20 : vector<1x256xi1> to vector<1x256xi1>
    %72 = vector.broadcast %71 : vector<1x256xi1> to vector<8x256xi1>
    %73 = vector.broadcast %cst_32 : f32 to vector<8x256xf32>
    %74 = arith.select %72, %70, %73 : vector<8x256xi1>, vector<8x256xf32>
    %75 = arith.addf %66, %74 : vector<8x256xf32>
    %c0_33 = arith.constant 0 : index
    %c0_34 = arith.constant 0 : index
    %c32 = arith.constant 32 : index
    %76 = vector.load %arg0[%c0_33, %c0_34, %c32] : memref<2x8x290xf32, #tpu.memory_space<vmem>>, vector<1x8x256xf32>
    %77 = vector.shape_cast %76 : vector<1x8x256xf32> to vector<8x256xf32>
    %78 = vector.broadcast %27 : vector<8x1xf32> to vector<8x256xf32>
    %79 = arith.mulf %77, %78 : vector<8x256xf32>
    %cst_35 = arith.constant 0.000000e+00 : f32
    %80 = vector.shape_cast %18 : vector<1x256xi1> to vector<1x256xi1>
    %81 = vector.broadcast %80 : vector<1x256xi1> to vector<8x256xi1>
    %82 = vector.broadcast %cst_35 : f32 to vector<8x256xf32>
    %83 = arith.select %81, %79, %82 : vector<8x256xi1>, vector<8x256xf32>
    %84 = arith.addf %75, %83 : vector<8x256xf32>
    %c0_36 = arith.constant 0 : index
    %c0_37 = arith.constant 0 : index
    %c33 = arith.constant 33 : index
    %85 = vector.load %arg0[%c0_36, %c0_37, %c33] : memref<2x8x290xf32, #tpu.memory_space<vmem>>, vector<1x8x256xf32>
    %86 = vector.shape_cast %85 : vector<1x8x256xf32> to vector<8x256xf32>
    %87 = vector.broadcast %28 : vector<8x1xf32> to vector<8x256xf32>
    %88 = arith.mulf %86, %87 : vector<8x256xf32>
    %89 = arith.addf %84, %88 : vector<8x256xf32>
    %c0_38 = arith.constant 0 : index
    %c0_39 = arith.constant 0 : index
    %c34 = arith.constant 34 : index
    %90 = vector.load %arg0[%c0_38, %c0_39, %c34] : memref<2x8x290xf32, #tpu.memory_space<vmem>>, vector<1x8x256xf32>
    %91 = vector.shape_cast %90 : vector<1x8x256xf32> to vector<8x256xf32>
    %92 = vector.broadcast %29 : vector<8x1xf32> to vector<8x256xf32>
    %93 = arith.mulf %91, %92 : vector<8x256xf32>
    %cst_40 = arith.constant 0.000000e+00 : f32
    %94 = vector.shape_cast %20 : vector<1x256xi1> to vector<1x256xi1>
    %95 = vector.broadcast %94 : vector<1x256xi1> to vector<8x256xi1>
    %96 = vector.broadcast %cst_40 : f32 to vector<8x256xf32>
    %97 = arith.select %95, %93, %96 : vector<8x256xi1>, vector<8x256xf32>
    %98 = arith.addf %89, %97 : vector<8x256xf32>
    %cst_41 = arith.constant dense<0.000000e+00> : vector<8x256xf32>
    %99 = tpu.matmul %30, %98, %cst_41 {dimension_numbers = #tpu.dot_dimension_numbers<[1], [0], [0], [1], [0, 0, 1, 1], [], []>, precision = #tpu.contract_precision<fp32>} : vector<8x8xf32>, vector<8x256xf32>, vector<8x256xf32> -> vector<8x256xf32>
    %cst_42 = arith.constant dense<0.000000e+00> : vector<8xf32>
    %100 = vector.multi_reduction <add>, %99, %cst_42 [1] : vector<8x256xf32> to vector<8xf32>
    %101 = vector.shape_cast %100 : vector<8xf32> to vector<8x1xf32>
    %102 = arith.mulf %99, %99 : vector<8x256xf32>
    %cst_43 = arith.constant dense<0.000000e+00> : vector<8xf32>
    %103 = vector.multi_reduction <add>, %102, %cst_43 [1] : vector<8x256xf32> to vector<8xf32>
    %104 = vector.shape_cast %103 : vector<8xf32> to vector<8x1xf32>
    %c1_44 = arith.constant 1 : index
    %c0_45 = arith.constant 0 : index
    %c0_46 = arith.constant 0 : index
    %105 = vector.load %arg0[%c1_44, %c0_45, %c0_46] : memref<2x8x290xf32, #tpu.memory_space<vmem>>, vector<1x8x256xf32>
    %106 = vector.shape_cast %105 : vector<1x8x256xf32> to vector<8x256xf32>
    %107 = vector.broadcast %21 : vector<8x1xf32> to vector<8x256xf32>
    %108 = arith.mulf %106, %107 : vector<8x256xf32>
    %cst_47 = arith.constant 0.000000e+00 : f32
    %109 = vector.shape_cast %18 : vector<1x256xi1> to vector<1x256xi1>
    %110 = vector.broadcast %109 : vector<1x256xi1> to vector<8x256xi1>
    %111 = vector.broadcast %cst_47 : f32 to vector<8x256xf32>
    %112 = arith.select %110, %108, %111 : vector<8x256xi1>, vector<8x256xf32>
    %c1_48 = arith.constant 1 : index
    %c0_49 = arith.constant 0 : index
    %c1_50 = arith.constant 1 : index
    %113 = vector.load %arg0[%c1_48, %c0_49, %c1_50] : memref<2x8x290xf32, #tpu.memory_space<vmem>>, vector<1x8x256xf32>
    %114 = vector.shape_cast %113 : vector<1x8x256xf32> to vector<8x256xf32>
    %115 = vector.broadcast %22 : vector<8x1xf32> to vector<8x256xf32>
    %116 = arith.mulf %114, %115 : vector<8x256xf32>
    %117 = arith.addf %112, %116 : vector<8x256xf32>
    %c1_51 = arith.constant 1 : index
    %c0_52 = arith.constant 0 : index
    %c2_53 = arith.constant 2 : index
    %118 = vector.load %arg0[%c1_51, %c0_52, %c2_53] : memref<2x8x290xf32, #tpu.memory_space<vmem>>, vector<1x8x256xf32>
    %119 = vector.shape_cast %118 : vector<1x8x256xf32> to vector<8x256xf32>
    %120 = vector.broadcast %23 : vector<8x1xf32> to vector<8x256xf32>
    %121 = arith.mulf %119, %120 : vector<8x256xf32>
    %cst_54 = arith.constant 0.000000e+00 : f32
    %122 = vector.shape_cast %20 : vector<1x256xi1> to vector<1x256xi1>
    %123 = vector.broadcast %122 : vector<1x256xi1> to vector<8x256xi1>
    %124 = vector.broadcast %cst_54 : f32 to vector<8x256xf32>
    %125 = arith.select %123, %121, %124 : vector<8x256xi1>, vector<8x256xf32>
    %126 = arith.addf %117, %125 : vector<8x256xf32>
    %c1_55 = arith.constant 1 : index
    %c0_56 = arith.constant 0 : index
    %c16_57 = arith.constant 16 : index
    %127 = vector.load %arg0[%c1_55, %c0_56, %c16_57] : memref<2x8x290xf32, #tpu.memory_space<vmem>>, vector<1x8x256xf32>
    %128 = vector.shape_cast %127 : vector<1x8x256xf32> to vector<8x256xf32>
    %129 = vector.broadcast %24 : vector<8x1xf32> to vector<8x256xf32>
    %130 = arith.mulf %128, %129 : vector<8x256xf32>
    %cst_58 = arith.constant 0.000000e+00 : f32
    %131 = vector.shape_cast %18 : vector<1x256xi1> to vector<1x256xi1>
    %132 = vector.broadcast %131 : vector<1x256xi1> to vector<8x256xi1>
    %133 = vector.broadcast %cst_58 : f32 to vector<8x256xf32>
    %134 = arith.select %132, %130, %133 : vector<8x256xi1>, vector<8x256xf32>
    %135 = arith.addf %126, %134 : vector<8x256xf32>
    %c1_59 = arith.constant 1 : index
    %c0_60 = arith.constant 0 : index
    %c17_61 = arith.constant 17 : index
    %136 = vector.load %arg0[%c1_59, %c0_60, %c17_61] : memref<2x8x290xf32, #tpu.memory_space<vmem>>, vector<1x8x256xf32>
    %137 = vector.shape_cast %136 : vector<1x8x256xf32> to vector<8x256xf32>
    %138 = vector.broadcast %25 : vector<8x1xf32> to vector<8x256xf32>
    %139 = arith.mulf %137, %138 : vector<8x256xf32>
    %140 = arith.addf %135, %139 : vector<8x256xf32>
    %c1_62 = arith.constant 1 : index
    %c0_63 = arith.constant 0 : index
    %c18_64 = arith.constant 18 : index
    %141 = vector.load %arg0[%c1_62, %c0_63, %c18_64] : memref<2x8x290xf32, #tpu.memory_space<vmem>>, vector<1x8x256xf32>
    %142 = vector.shape_cast %141 : vector<1x8x256xf32> to vector<8x256xf32>
    %143 = vector.broadcast %26 : vector<8x1xf32> to vector<8x256xf32>
    %144 = arith.mulf %142, %143 : vector<8x256xf32>
    %cst_65 = arith.constant 0.000000e+00 : f32
    %145 = vector.shape_cast %20 : vector<1x256xi1> to vector<1x256xi1>
    %146 = vector.broadcast %145 : vector<1x256xi1> to vector<8x256xi1>
    %147 = vector.broadcast %cst_65 : f32 to vector<8x256xf32>
    %148 = arith.select %146, %144, %147 : vector<8x256xi1>, vector<8x256xf32>
    %149 = arith.addf %140, %148 : vector<8x256xf32>
    %c1_66 = arith.constant 1 : index
    %c0_67 = arith.constant 0 : index
    %c32_68 = arith.constant 32 : index
    %150 = vector.load %arg0[%c1_66, %c0_67, %c32_68] : memref<2x8x290xf32, #tpu.memory_space<vmem>>, vector<1x8x256xf32>
    %151 = vector.shape_cast %150 : vector<1x8x256xf32> to vector<8x256xf32>
    %152 = vector.broadcast %27 : vector<8x1xf32> to vector<8x256xf32>
    %153 = arith.mulf %151, %152 : vector<8x256xf32>
    %cst_69 = arith.constant 0.000000e+00 : f32
    %154 = vector.shape_cast %18 : vector<1x256xi1> to vector<1x256xi1>
    %155 = vector.broadcast %154 : vector<1x256xi1> to vector<8x256xi1>
    %156 = vector.broadcast %cst_69 : f32 to vector<8x256xf32>
    %157 = arith.select %155, %153, %156 : vector<8x256xi1>, vector<8x256xf32>
    %158 = arith.addf %149, %157 : vector<8x256xf32>
    %c1_70 = arith.constant 1 : index
    %c0_71 = arith.constant 0 : index
    %c33_72 = arith.constant 33 : index
    %159 = vector.load %arg0[%c1_70, %c0_71, %c33_72] : memref<2x8x290xf32, #tpu.memory_space<vmem>>, vector<1x8x256xf32>
    %160 = vector.shape_cast %159 : vector<1x8x256xf32> to vector<8x256xf32>
    %161 = vector.broadcast %28 : vector<8x1xf32> to vector<8x256xf32>
    %162 = arith.mulf %160, %161 : vector<8x256xf32>
    %163 = arith.addf %158, %162 : vector<8x256xf32>
    %c1_73 = arith.constant 1 : index
    %c0_74 = arith.constant 0 : index
    %c34_75 = arith.constant 34 : index
    %164 = vector.load %arg0[%c1_73, %c0_74, %c34_75] : memref<2x8x290xf32, #tpu.memory_space<vmem>>, vector<1x8x256xf32>
    %165 = vector.shape_cast %164 : vector<1x8x256xf32> to vector<8x256xf32>
    %166 = vector.broadcast %29 : vector<8x1xf32> to vector<8x256xf32>
    %167 = arith.mulf %165, %166 : vector<8x256xf32>
    %cst_76 = arith.constant 0.000000e+00 : f32
    %168 = vector.shape_cast %20 : vector<1x256xi1> to vector<1x256xi1>
    %169 = vector.broadcast %168 : vector<1x256xi1> to vector<8x256xi1>
    %170 = vector.broadcast %cst_76 : f32 to vector<8x256xf32>
    %171 = arith.select %169, %167, %170 : vector<8x256xi1>, vector<8x256xf32>
    %172 = arith.addf %163, %171 : vector<8x256xf32>
    %cst_77 = arith.constant dense<0.000000e+00> : vector<8x256xf32>
    %173 = tpu.matmul %30, %172, %cst_77 {dimension_numbers = #tpu.dot_dimension_numbers<[1], [0], [0], [1], [0, 0, 1, 1], [], []>, precision = #tpu.contract_precision<fp32>} : vector<8x8xf32>, vector<8x256xf32>, vector<8x256xf32> -> vector<8x256xf32>
    %cst_78 = arith.constant dense<0.000000e+00> : vector<8xf32>
    %174 = vector.multi_reduction <add>, %173, %cst_78 [1] : vector<8x256xf32> to vector<8xf32>
    %175 = vector.shape_cast %174 : vector<8xf32> to vector<8x1xf32>
    %176 = arith.mulf %173, %173 : vector<8x256xf32>
    %cst_79 = arith.constant dense<0.000000e+00> : vector<8xf32>
    %177 = vector.multi_reduction <add>, %176, %cst_79 [1] : vector<8x256xf32> to vector<8xf32>
    %178 = vector.shape_cast %177 : vector<8xf32> to vector<8x1xf32>
    %179 = arith.addf %101, %175 : vector<8x1xf32>
    %180 = arith.addf %104, %178 : vector<8x1xf32>
    %cst_80 = arith.constant 0.001953125 : f32
    %181 = vector.broadcast %cst_80 : f32 to vector<8x1xf32>
    %182 = arith.mulf %179, %181 : vector<8x1xf32>
    %cst_81 = arith.constant 0.001953125 : f32
    %183 = vector.broadcast %cst_81 : f32 to vector<8x1xf32>
    %184 = arith.mulf %180, %183 : vector<8x1xf32>
    %185 = arith.mulf %182, %182 : vector<8x1xf32>
    %186 = arith.subf %184, %185 : vector<8x1xf32>
    %cst_82 = arith.constant 0.000000e+00 : f32
    %187 = vector.broadcast %cst_82 : f32 to vector<8x1xf32>
    %188 = arith.maximumf %186, %187 : vector<8x1xf32>
    %c0_83 = arith.constant 0 : index
    %c0_84 = arith.constant 0 : index
    %189 = vector.load %arg3[%c0_83, %c0_84] : memref<8x1xf32, #tpu.memory_space<vmem>>, vector<8x1xf32>
    %cst_85 = arith.constant 9.99999974E-6 : f32
    %190 = vector.broadcast %cst_85 : f32 to vector<8x1xf32>
    %191 = arith.addf %188, %190 : vector<8x1xf32>
    %192 = math.rsqrt %191 : vector<8x1xf32>
    %193 = arith.mulf %189, %192 : vector<8x1xf32>
    %c0_86 = arith.constant 0 : index
    %c0_87 = arith.constant 0 : index
    %194 = vector.load %arg4[%c0_86, %c0_87] : memref<8x1xf32, #tpu.memory_space<vmem>>, vector<8x1xf32>
    %195 = arith.mulf %182, %193 : vector<8x1xf32>
    %196 = arith.subf %194, %195 : vector<8x1xf32>
    %197 = vector.broadcast %193 : vector<8x1xf32> to vector<8x256xf32>
    %198 = arith.mulf %99, %197 : vector<8x256xf32>
    %199 = vector.broadcast %196 : vector<8x1xf32> to vector<8x256xf32>
    %200 = arith.addf %198, %199 : vector<8x256xf32>
    %cst_88 = arith.constant 0.000000e+00 : f32
    %201 = vector.broadcast %cst_88 : f32 to vector<8x256xf32>
    %202 = arith.maximumf %200, %201 : vector<8x256xf32>
    %c0_89 = arith.constant 0 : index
    %c0_90 = arith.constant 0 : index
    %c0_91 = arith.constant 0 : index
    %203 = vector.load %arg5[%c0_89, %c0_90, %c0_91] : memref<2x8x256xf32, #tpu.memory_space<vmem>>, vector<1x8x256xf32>
    %204 = vector.shape_cast %203 : vector<1x8x256xf32> to vector<8x256xf32>
    %205 = vector.shape_cast %202 : vector<8x256xf32> to vector<1x8x256xf32>
    tpu.vector_store %arg5[%c0_89, %c0_90, %c0_91], %205 {strides = array<i32>} : memref<2x8x256xf32, #tpu.memory_space<vmem>>, vector<1x8x256xf32>,
    %206 = vector.broadcast %193 : vector<8x1xf32> to vector<8x256xf32>
    %207 = arith.mulf %173, %206 : vector<8x256xf32>
    %208 = vector.broadcast %196 : vector<8x1xf32> to vector<8x256xf32>
    %209 = arith.addf %207, %208 : vector<8x256xf32>
    %cst_92 = arith.constant 0.000000e+00 : f32
    %210 = vector.broadcast %cst_92 : f32 to vector<8x256xf32>
    %211 = arith.maximumf %209, %210 : vector<8x256xf32>
    %c1_93 = arith.constant 1 : index
    %c0_94 = arith.constant 0 : index
    %c0_95 = arith.constant 0 : index
    %212 = vector.load %arg5[%c1_93, %c0_94, %c0_95] : memref<2x8x256xf32, #tpu.memory_space<vmem>>, vector<1x8x256xf32>
    %213 = vector.shape_cast %212 : vector<1x8x256xf32> to vector<8x256xf32>
    %214 = vector.shape_cast %211 : vector<8x256xf32> to vector<1x8x256xf32>
    tpu.vector_store %arg5[%c1_93, %c0_94, %c0_95], %214 {strides = array<i32>} : memref<2x8x256xf32, #tpu.memory_space<vmem>>, vector<1x8x256xf32>,
    return
  }
}

</mosaic_0001>

<llo_original>
// kernel: tpu_custom_call.1
$region0: #{tpu_custom_call.1}
  #allocation0 [shape = 'u32[]', space=smem, size = 0x4, offset = 0x4, fixed_abs, tag = 'smem constant byte address 0x4 - core index']
  #allocation1 [shape = 'u32[72,128]{1,0:T(1,128)}', space=vmem, size = 0x9000, scoped, tag = 'internal scratch']
  %s0 = inlined_call_operand.hbm [shape: f32[2,8,290], index: 0, kind: input, shape index: {}]
  %s1 = inlined_call_operand.vmem [shape: f32[8,9], index: 1, kind: input, shape index: {}]
  %s2 = inlined_call_operand.vmem [shape: f32[8,8], index: 2, kind: input, shape index: {}]
  %s3 = inlined_call_operand.vmem [shape: f32[8,1], index: 3, kind: input, shape index: {}]
  %s4 = inlined_call_operand.vmem [shape: f32[8,1], index: 4, kind: input, shape index: {}]
  %s5 = inlined_call_operand.hbm [shape: f32[2,8,256], index: 5, kind: output, shape index: {}]
  %s6 = sld [smem:[#allocation0]]
  $region34: #{tpu_custom_call.1} parent=0
    _
  %s8 = ssub.s32 1, %s6
  %s9 = scalar_select 0, %s8, %s6
  $region1: #{tpu_custom_call.1} parent=0
    #allocation2 [shape = 'u8[24576]{0}', space=vmem, size = 0x6000, scoped, tag = 'input window, operand 0, single buffered']
    #allocation3 [shape = 's32[1]{0}', space=sflag, size = 0x4, scoped, tag = 'scoped memory for tpu_custom_call.1']
    #allocation4 [shape = 's32[1]{0}', space=sflag, size = 0x4, scoped, tag = 'scoped memory for tpu_custom_call.1']
    #allocation5 [shape = 'u8[16384]{0}', space=vmem, size = 0x4000, scoped, tag = 'output window, operand 0, single buffered']
    %10 = vsyncpa [#allocation3], 0
    %11 = vsyncpa [#allocation4], 0
    // Predicated region
    $region2: #{tpu_custom_call.1} parent=1 // pred_check
      _
    $region3: #{tpu_custom_call.1} parent=1 // pred_check_branch
      %13 = sbr.rel (0) target = $region5
    $region4: #{tpu_custom_call.1} parent=1 // pred_region
      %15 = vsyncadd [#allocation3], 0
      %s16 = sshll.u32 %s0, 4
      %s17 = int_to_ptr.hbm [resolvable:$true] %s16
      %s18 = sshll.u32 [#allocation2], 4
      %s19 = int_to_ptr.vmem [resolvable:$true] %s18
      %24 = dma.hbm_to_vmem [thread:$0]  %s17, 768, %s19, [#allocation3], 384, 384, 24
    $region5: #{tpu_custom_call.1} parent=1 // pred_fallthru
      _
    // Predicated region
    $region6: #{tpu_custom_call.1} parent=1 // pred_check
      _
    $region7: #{tpu_custom_call.1} parent=1 // pred_check_branch
      %26 = sbr.rel (0) target = $region9
    $region8: #{tpu_custom_call.1} parent=1 // pred_region
      _
    $region9: #{tpu_custom_call.1} parent=1 // pred_fallthru
      _
    // Predicated region
    $region10: #{tpu_custom_call.1} parent=1 // pred_check
      _
    $region11: #{tpu_custom_call.1} parent=1 // pred_check_branch
      %28 = sbr.rel (0) target = $region13
    $region12: #{tpu_custom_call.1} parent=1 // pred_region
      _
    $region13: #{tpu_custom_call.1} parent=1 // pred_fallthru
      _
    // Predicated region
    $region14: #{tpu_custom_call.1} parent=1 // pred_check
      _
    $region15: #{tpu_custom_call.1} parent=1 // pred_check_branch
      %30 = sbr.rel (0) target = $region17
    $region16: #{tpu_custom_call.1} parent=1 // pred_region
      _
    $region17: #{tpu_custom_call.1} parent=1 // pred_fallthru
      _
    // Predicated region
    $region18: #{tpu_custom_call.1} parent=1 // pred_check
      _
    $region19: #{tpu_custom_call.1} parent=1 // pred_check_branch
      %32 = sbr.rel (0) target = $region21
    $region20: #{tpu_custom_call.1} parent=1 // pred_region
      _
    $region21: #{tpu_custom_call.1} parent=1 // pred_fallthru
      _
    // Predicated region
    $region22: #{tpu_custom_call.1} parent=1 // pred_check
      _
    $region23: #{tpu_custom_call.1} parent=1 // pred_check_branch
      %34 = sbr.rel (0) target = $region25
    $region24: #{tpu_custom_call.1} parent=1 // pred_region
      %36 = dma.done [#allocation3], 768
    $region25: #{tpu_custom_call.1} parent=1 // pred_fallthru
      _
    %v37 = vlaneseq
    %v38 = vand.u32 %v37, 127
    %v39 = vadd.s32 %v38, 128
    %vm40 = vcmp.lt.s32.totalorder %v38, 0
    %v41 = vsub.s32 0, %v38
    %v42 = vsel %vm40, %v41, %v38
    %v43 = vshrl.u32 %v42, 4
    %v44 = vand.u32 %v42, 15
    %v45 = vsub.s32 0, %v44
    %v46 = vsel %vm40, %v45, %v44
    %vm47 = vcmp.lt.s32.totalorder %v39, 0
    %v48 = vsub.s32 0, %v39
    %v49 = vsel %vm47, %v48, %v39
    %v50 = vshrl.u32 %v49, 4
    %v51 = vand.u32 %v49, 15
    %v52 = vsub.s32 0, %v51
    %v53 = vsel %vm47, %v52, %v51
    %vm54 = vcmp.ne.s32.totalorder %v46, 0
    %vm55 = vcmp.ne.s32.totalorder %v53, 0
    %vm56 = vcmp.lt.s32.totalorder %v46, 0
    %vm57 = vcmp.lt.s32.totalorder %v53, 0
    %vm58 = vmand %vm56, %vm54
    %vm59 = vmand %vm57, %vm55
    %v60 = vadd.s32 %v46, 16
    %v61 = vadd.s32 %v53, 16
    %v62 = vsel %vm58, %v60, %v46
    %v63 = vsel %vm59, %v61, %v53
    %vm64 = vcmp.ge.s32.totalorder %v62, 1
    %vm65 = vcmp.ge.s32.totalorder %v63, 1
    %vm66 = vcmp.lt.s32.totalorder %v62, 15
    %vm67 = vcmp.lt.s32.totalorder %v63, 15
    %v68 = vld [vmem:[%s1] sm:$0xff]
    %v69 = vld [vmem:[%s2] sm:$0xff]
    %v70 = vld [vmem:[#allocation2] sm:$0xff]
    %v71 = vld [vmem:[#allocation2 + $0x8] sm:$0xff]
    %73 = vset.pattern.permute.xlu0 0
    %74 = vperm.xlu0 %73, %v68
    %v75 = vpop.permute.xlu0 %74
    %v77 = vmul.f32 %v70, %v75
    %v78 = vmul.f32 %v71, %v75
    %v79 = vsel %vm64, 1, 0
    %v80 = vsel %vm65, 1, 0
    %vm81 = vcmp.eq.s32.totalorder %v79, 1
    %vm82 = vcmp.eq.s32.totalorder %v80, 1
    %v83 = vsel %vm81, %v77, 0.0
    %v84 = vsel %vm82, %v78, 0.0
    %v85 = vld [vmem:[#allocation2] sm:$0xff]
    %v86 = vld [vmem:[#allocation2 + $0x8] sm:$0xff]
    %v87 = vld [vmem:[#allocation2 + $0x10] sm:$0xff]
    %88 = vset.pattern.permute.xlu0 1
    %89 = vperm.xlu0 %88, %v68
    %v90 = vpop.permute.xlu0 %89
    %v92 = vmul.f32 %v85, %v90
    %v93 = vmul.f32 %v86, %v90
    %v94 = vmul.f32 %v87, %v90
    %98 = vrot.lane.b32.xlu0 %v92, 127
    %v99 = vpop.permute.xlu0 %98
    %100 = vrot.lane.b32.xlu0 %v93, 127
    %v101 = vpop.permute.xlu0 %100
    %102 = vrot.lane.b32.xlu0 %v94, 127
    %v103 = vpop.permute.xlu0 %102
    %vm104 = vcmask 1039360
    %v105 = vsel %vm104, %v99, %v101
    %v106 = vsel %vm104, %v101, %v103
    %v109 = vadd.f32 %v83, %v105
    %v110 = vadd.f32 %v84, %v106
    %111 = vset.pattern.permute.xlu0 2
    %112 = vperm.xlu0 %111, %v68
    %v113 = vpop.permute.xlu0 %112
    %v115 = vmul.f32 %v85, %v113
    %v116 = vmul.f32 %v86, %v113
    %v117 = vmul.f32 %v87, %v113
    %v118 = vsel %vm66, 1, 0
    %v119 = vsel %vm67, 1, 0
    %vm120 = vcmp.eq.s32.totalorder %v118, 1
    %vm121 = vcmp.eq.s32.totalorder %v119, 1
    %125 = vrot.lane.b32.xlu0 %v115, 126
    %v126 = vpop.permute.xlu0 %125
    %127 = vrot.lane.b32.xlu0 %v116, 126
    %v128 = vpop.permute.xlu0 %127
    %129 = vrot.lane.b32.xlu0 %v117, 126
    %v130 = vpop.permute.xlu0 %129
    %vm131 = vcmask 1031168
    %v132 = vsel %vm131, %v126, %v128
    %v133 = vsel %vm131, %v128, %v130
    %v136 = vsel %vm120, %v132, 0.0
    %v137 = vsel %vm121, %v133, 0.0
    %v138 = vadd.f32 %v109, %v136
    %v139 = vadd.f32 %v110, %v137
    %140 = vset.pattern.permute.xlu0 3
    %141 = vperm.xlu0 %140, %v68
    %v142 = vpop.permute.xlu0 %141
    %v144 = vmul.f32 %v85, %v142
    %v145 = vmul.f32 %v86, %v142
    %v146 = vmul.f32 %v87, %v142
    %150 = vrot.lane.b32.xlu0 %v144, 112
    %v151 = vpop.permute.xlu0 %150
    %152 = vrot.lane.b32.xlu0 %v145, 112
    %v153 = vpop.permute.xlu0 %152
    %154 = vrot.lane.b32.xlu0 %v146, 112
    %v155 = vpop.permute.xlu0 %154
    %vm156 = vcmask 916480
    %v157 = vsel %vm156, %v151, %v153
    %v158 = vsel %vm156, %v153, %v155
    %v161 = vsel %vm81, %v157, 0.0
    %v162 = vsel %vm82, %v158, 0.0
    %v163 = vadd.f32 %v138, %v161
    %v164 = vadd.f32 %v139, %v162
    %165 = vset.pattern.permute.xlu0 4
    %166 = vperm.xlu0 %165, %v68
    %v167 = vpop.permute.xlu0 %166
    %v169 = vmul.f32 %v85, %v167
    %v170 = vmul.f32 %v86, %v167
    %v171 = vmul.f32 %v87, %v167
    %175 = vrot.lane.b32.xlu0 %v169, 111
    %v176 = vpop.permute.xlu0 %175
    %177 = vrot.lane.b32.xlu0 %v170, 111
    %v178 = vpop.permute.xlu0 %177
    %179 = vrot.lane.b32.xlu0 %v171, 111
    %v180 = vpop.permute.xlu0 %179
    %vm181 = vcmask 908288
    %v182 = vsel %vm181, %v176, %v178
    %v183 = vsel %vm181, %v178, %v180
    %v186 = vadd.f32 %v163, %v182
    %v187 = vadd.f32 %v164, %v183
    %188 = vset.pattern.permute.xlu0 5
    %189 = vperm.xlu0 %188, %v68
    %v190 = vpop.permute.xlu0 %189
    %v192 = vmul.f32 %v85, %v190
    %v193 = vmul.f32 %v86, %v190
    %v194 = vmul.f32 %v87, %v190
    %198 = vrot.lane.b32.xlu0 %v192, 110
    %v199 = vpop.permute.xlu0 %198
    %200 = vrot.lane.b32.xlu0 %v193, 110
    %v201 = vpop.permute.xlu0 %200
    %202 = vrot.lane.b32.xlu0 %v194, 110
    %v203 = vpop.permute.xlu0 %202
    %vm204 = vcmask 900096
    %v205 = vsel %vm204, %v199, %v201
    %v206 = vsel %vm204, %v201, %v203
    %v209 = vsel %vm120, %v205, 0.0
    %v210 = vsel %vm121, %v206, 0.0
    %v211 = vadd.f32 %v186, %v209
    %v212 = vadd.f32 %v187, %v210
    %213 = vset.pattern.permute.xlu0 6
    %214 = vperm.xlu0 %213, %v68
    %v215 = vpop.permute.xlu0 %214
    %v217 = vmul.f32 %v85, %v215
    %v218 = vmul.f32 %v86, %v215
    %v219 = vmul.f32 %v87, %v215
    %223 = vrot.lane.b32.xlu0 %v217, 96
    %v224 = vpop.permute.xlu0 %223
    %225 = vrot.lane.b32.xlu0 %v218, 96
    %v226 = vpop.permute.xlu0 %225
    %227 = vrot.lane.b32.xlu0 %v219, 96
    %v228 = vpop.permute.xlu0 %227
    %vm229 = vcmask 785408
    %v230 = vsel %vm229, %v224, %v226
    %v231 = vsel %vm229, %v226, %v228
    %v234 = vsel %vm81, %v230, 0.0
    %v235 = vsel %vm82, %v231, 0.0
    %v236 = vadd.f32 %v211, %v234
    %v237 = vadd.f32 %v212, %v235
    %238 = vset.pattern.permute.xlu0 7
    %239 = vperm.xlu0 %238, %v68
    %v240 = vpop.permute.xlu0 %239
    %v242 = vmul.f32 %v85, %v240
    %v243 = vmul.f32 %v86, %v240
    %v244 = vmul.f32 %v87, %v240
    %248 = vrot.lane.b32.xlu0 %v242, 95
    %v249 = vpop.permute.xlu0 %248
    %250 = vrot.lane.b32.xlu0 %v243, 95
    %v251 = vpop.permute.xlu0 %250
    %252 = vrot.lane.b32.xlu0 %v244, 95
    %v253 = vpop.permute.xlu0 %252
    %vm254 = vcmask 777216
    %v255 = vsel %vm254, %v249, %v251
    %v256 = vsel %vm254, %v251, %v253
    %v259 = vadd.f32 %v236, %v255
    %v260 = vadd.f32 %v237, %v256
    %261 = vset.pattern.permute.xlu0 8
    %262 = vperm.xlu0 %261, %v68
    %v263 = vpop.permute.xlu0 %262
    %v265 = vmul.f32 %v85, %v263
    %v266 = vmul.f32 %v86, %v263
    %v267 = vmul.f32 %v87, %v263
    %271 = vrot.lane.b32.xlu0 %v265, 94
    %v272 = vpop.permute.xlu0 %271
    %273 = vrot.lane.b32.xlu0 %v266, 94
    %v274 = vpop.permute.xlu0 %273
    %275 = vrot.lane.b32.xlu0 %v267, 94
    %v276 = vpop.permute.xlu0 %275
    %vm277 = vcmask 769024
    %v278 = vsel %vm277, %v272, %v274
    %v279 = vsel %vm277, %v274, %v276
    %v282 = vsel %vm120, %v278, 0.0
    %v283 = vsel %vm121, %v279, 0.0
    %v284 = vadd.f32 %v259, %v282
    %v285 = vadd.f32 %v260, %v283
    %vm286 = vcmask 64512
    %v288 = vsel %vm286, %v69, 0
    %290 = vmatpush.msra.mxu0 0.0
    %291 = vmatpush.msra.mxu0 0.0
    %292 = vmatpush.msra.mxu0 0.0
    %293 = vmatpush.msra.mxu0 0.0
    %294 = vmatpush.msra.mxu0 0.0
    %295 = vmatpush.msra.mxu0 0.0
    %296 = vmatpush.msra.mxu0 0.0
    %297 = vmatpush.msra.mxu0 0.0
    %298 = vmatpush.msra.mxu0 0.0
    %299 = vmatpush.msra.mxu0 0.0
    %300 = vmatpush.msra.mxu0 0.0
    %301 = vmatpush.msra.mxu0 0.0
    %302 = vmatpush.msra.mxu0 0.0
    %303 = vmatpush.msra.mxu0 0.0
    %304 = vmatpush.msra.mxu0 0.0
    %v305 = vand.u32 %v284, 4294901760
    %306 = vmatpush.msra.mxu0 %v305
    %v307 = vand.u32 %v288, 4294901760
    %v308 = vsub.f32 %v288, %v307
    %v309 = vand.u32 %v308, 4294901760
    %v310 = vsub.f32 %v308, %v309
    %v311 = vand.u32 %v310, 4294901760
    %312 = vmatmul.f32.gmra.mxu0 %v311
    %v313 = vpop.f32.mrf.mxu0
    %v314 = vadd.f32 0.0, %v313
    %315 = vdwg.mxu0
    %316 = vmatpush.msra.mxu0 0.0
    %317 = vmatpush.msra.mxu0 0.0
    %318 = vmatpush.msra.mxu0 0.0
    %319 = vmatpush.msra.mxu0 0.0
    %320 = vmatpush.msra.mxu0 0.0
    %321 = vmatpush.msra.mxu0 0.0
    %322 = vmatpush.msra.mxu0 0.0
    %323 = vmatpush.msra.mxu0 0.0
    %324 = vmatpush.msra.mxu0 0.0
    %325 = vmatpush.msra.mxu0 0.0
    %326 = vmatpush.msra.mxu0 0.0
    %327 = vmatpush.msra.mxu0 0.0
    %328 = vmatpush.msra.mxu0 0.0
    %329 = vmatpush.msra.mxu0 0.0
    %330 = vmatpush.msra.mxu0 0.0
    %v331 = vand.u32 %v284, 4294901760
    %v332 = vsub.f32 %v284, %v331
    %v333 = vand.u32 %v332, 4294901760
    %v334 = vsub.f32 %v332, %v333
    %v335 = vand.u32 %v334, 4294901760
    %336 = vmatpush.msra.mxu0 %v335
    %v337 = vand.u32 %v288, 4294901760
    %338 = vmatmul.f32.gmra.mxu0 %v337
    %v339 = vpop.f32.mrf.mxu0
    %v340 = vadd.f32 %v314, %v339
    %341 = vdwg.mxu0
    %342 = vmatpush.msra.mxu0 0.0
    %343 = vmatpush.msra.mxu0 0.0
    %344 = vmatpush.msra.mxu0 0.0
    %345 = vmatpush.msra.mxu0 0.0
    %346 = vmatpush.msra.mxu0 0.0
    %347 = vmatpush.msra.mxu0 0.0
    %348 = vmatpush.msra.mxu0 0.0
    %349 = vmatpush.msra.mxu0 0.0
    %350 = vmatpush.msra.mxu0 0.0
    %351 = vmatpush.msra.mxu0 0.0
    %352 = vmatpush.msra.mxu0 0.0
    %353 = vmatpush.msra.mxu0 0.0
    %354 = vmatpush.msra.mxu0 0.0
    %355 = vmatpush.msra.mxu0 0.0
    %356 = vmatpush.msra.mxu0 0.0
    %v357 = vand.u32 %v284, 4294901760
    %v358 = vsub.f32 %v284, %v357
    %359 = vmatpush.msra.mxu0 %v358
    %v360 = vand.u32 %v288, 4294901760
    %v361 = vsub.f32 %v288, %v360
    %362 = vmatmul.f32.gmra.mxu0 %v361
    %v363 = vpop.f32.mrf.mxu0
    %v364 = vadd.f32 %v340, %v363
    %365 = vdwg.mxu0
    %366 = vmatpush.msra.mxu0 0.0
    %367 = vmatpush.msra.mxu0 0.0
    %368 = vmatpush.msra.mxu0 0.0
    %369 = vmatpush.msra.mxu0 0.0
    %370 = vmatpush.msra.mxu0 0.0
    %371 = vmatpush.msra.mxu0 0.0
    %372 = vmatpush.msra.mxu0 0.0
    %373 = vmatpush.msra.mxu0 0.0
    %374 = vmatpush.msra.mxu0 0.0
    %375 = vmatpush.msra.mxu0 0.0
    %376 = vmatpush.msra.mxu0 0.0
    %377 = vmatpush.msra.mxu0 0.0
    %378 = vmatpush.msra.mxu0 0.0
    %379 = vmatpush.msra.mxu0 0.0
    %380 = vmatpush.msra.mxu0 0.0
    %v381 = vand.u32 %v284, 4294901760
    %382 = vmatpush.msra.mxu0 %v381
    %v383 = vand.u32 %v288, 4294901760
    %v384 = vsub.f32 %v288, %v383
    %v385 = vand.u32 %v384, 4294901760
    %386 = vmatmul.f32.gmra.mxu0 %v385
    %v387 = vpop.f32.mrf.mxu0
    %v388 = vadd.f32 %v364, %v387
    %389 = vdwg.mxu0
    %390 = vmatpush.msra.mxu0 0.0
    %391 = vmatpush.msra.mxu0 0.0
    %392 = vmatpush.msra.mxu0 0.0
    %393 = vmatpush.msra.mxu0 0.0
    %394 = vmatpush.msra.mxu0 0.0
    %395 = vmatpush.msra.mxu0 0.0
    %396 = vmatpush.msra.mxu0 0.0
    %397 = vmatpush.msra.mxu0 0.0
    %398 = vmatpush.msra.mxu0 0.0
    %399 = vmatpush.msra.mxu0 0.0
    %400 = vmatpush.msra.mxu0 0.0
    %401 = vmatpush.msra.mxu0 0.0
    %402 = vmatpush.msra.mxu0 0.0
    %403 = vmatpush.msra.mxu0 0.0
    %404 = vmatpush.msra.mxu0 0.0
    %v405 = vand.u32 %v284, 4294901760
    %v406 = vsub.f32 %v284, %v405
    %v407 = vand.u32 %v406, 4294901760
    %408 = vmatpush.msra.mxu0 %v407
    %v409 = vand.u32 %v288, 4294901760
    %410 = vmatmul.f32.gmra.mxu0 %v409
    %v411 = vpop.f32.mrf.mxu0
    %v412 = vadd.f32 %v388, %v411
    %413 = vdwg.mxu0
    %414 = vmatpush.msra.mxu0 0.0
    %415 = vmatpush.msra.mxu0 0.0
    %416 = vmatpush.msra.mxu0 0.0
    %417 = vmatpush.msra.mxu0 0.0
    %418 = vmatpush.msra.mxu0 0.0
    %419 = vmatpush.msra.mxu0 0.0
    %420 = vmatpush.msra.mxu0 0.0
    %421 = vmatpush.msra.mxu0 0.0
    %422 = vmatpush.msra.mxu0 0.0
    %423 = vmatpush.msra.mxu0 0.0
    %424 = vmatpush.msra.mxu0 0.0
    %425 = vmatpush.msra.mxu0 0.0
    %426 = vmatpush.msra.mxu0 0.0
    %427 = vmatpush.msra.mxu0 0.0
    %428 = vmatpush.msra.mxu0 0.0
    %v429 = vand.u32 %v284, 4294901760
    %430 = vmatpush.msra.mxu0 %v429
    %v431 = vand.u32 %v288, 4294901760
    %432 = vmatmul.f32.gmra.mxu0 %v431
    %v433 = vpop.f32.mrf.mxu0
    %v434 = vadd.f32 %v412, %v433
    %435 = vdwg.mxu0
    %436 = vmatpush.msra.mxu0 0.0
    %437 = vmatpush.msra.mxu0 0.0
    %438 = vmatpush.msra.mxu0 0.0
    %439 = vmatpush.msra.mxu0 0.0
    %440 = vmatpush.msra.mxu0 0.0
    %441 = vmatpush.msra.mxu0 0.0
    %442 = vmatpush.msra.mxu0 0.0
    %443 = vmatpush.msra.mxu0 0.0
    %444 = vmatpush.msra.mxu0 0.0
    %445 = vmatpush.msra.mxu0 0.0
    %446 = vmatpush.msra.mxu0 0.0
    %447 = vmatpush.msra.mxu0 0.0
    %448 = vmatpush.msra.mxu0 0.0
    %449 = vmatpush.msra.mxu0 0.0
    %450 = vmatpush.msra.mxu0 0.0
    %v451 = vand.u32 %v285, 4294901760
    %452 = vmatpush.msra.mxu0 %v451
    %v453 = vand.u32 %v288, 4294901760
    %v454 = vsub.f32 %v288, %v453
    %v455 = vand.u32 %v454, 4294901760
    %v456 = vsub.f32 %v454, %v455
    %v457 = vand.u32 %v456, 4294901760
    %458 = vmatmul.f32.gmra.mxu0 %v457
    %v459 = vpop.f32.mrf.mxu0
    %v460 = vadd.f32 0.0, %v459
    %461 = vdwg.mxu0
    %462 = vmatpush.msra.mxu0 0.0
    %463 = vmatpush.msra.mxu0 0.0
    %464 = vmatpush.msra.mxu0 0.0
    %465 = vmatpush.msra.mxu0 0.0
    %466 = vmatpush.msra.mxu0 0.0
    %467 = vmatpush.msra.mxu0 0.0
    %468 = vmatpush.msra.mxu0 0.0
    %469 = vmatpush.msra.mxu0 0.0
    %470 = vmatpush.msra.mxu0 0.0
    %471 = vmatpush.msra.mxu0 0.0
    %472 = vmatpush.msra.mxu0 0.0
    %473 = vmatpush.msra.mxu0 0.0
    %474 = vmatpush.msra.mxu0 0.0
    %475 = vmatpush.msra.mxu0 0.0
    %476 = vmatpush.msra.mxu0 0.0
    %v477 = vand.u32 %v285, 4294901760
    %v478 = vsub.f32 %v285, %v477
    %v479 = vand.u32 %v478, 4294901760
    %v480 = vsub.f32 %v478, %v479
    %v481 = vand.u32 %v480, 4294901760
    %482 = vmatpush.msra.mxu0 %v481
    %v483 = vand.u32 %v288, 4294901760
    %484 = vmatmul.f32.gmra.mxu0 %v483
    %v485 = vpop.f32.mrf.mxu0
    %v486 = vadd.f32 %v460, %v485
    %487 = vdwg.mxu0
    %488 = vmatpush.msra.mxu0 0.0
    %489 = vmatpush.msra.mxu0 0.0
    %490 = vmatpush.msra.mxu0 0.0
    %491 = vmatpush.msra.mxu0 0.0
    %492 = vmatpush.msra.mxu0 0.0
    %493 = vmatpush.msra.mxu0 0.0
    %494 = vmatpush.msra.mxu0 0.0
    %495 = vmatpush.msra.mxu0 0.0
    %496 = vmatpush.msra.mxu0 0.0
    %497 = vmatpush.msra.mxu0 0.0
    %498 = vmatpush.msra.mxu0 0.0
    %499 = vmatpush.msra.mxu0 0.0
    %500 = vmatpush.msra.mxu0 0.0
    %501 = vmatpush.msra.mxu0 0.0
    %502 = vmatpush.msra.mxu0 0.0
    %v503 = vand.u32 %v285, 4294901760
    %v504 = vsub.f32 %v285, %v503
    %505 = vmatpush.msra.mxu0 %v504
    %v506 = vand.u32 %v288, 4294901760
    %v507 = vsub.f32 %v288, %v506
    %508 = vmatmul.f32.gmra.mxu0 %v507
    %v509 = vpop.f32.mrf.mxu0
    %v510 = vadd.f32 %v486, %v509
    %511 = vdwg.mxu0
    %512 = vmatpush.msra.mxu0 0.0
    %513 = vmatpush.msra.mxu0 0.0
    %514 = vmatpush.msra.mxu0 0.0
    %515 = vmatpush.msra.mxu0 0.0
    %516 = vmatpush.msra.mxu0 0.0
    %517 = vmatpush.msra.mxu0 0.0
    %518 = vmatpush.msra.mxu0 0.0
    %519 = vmatpush.msra.mxu0 0.0
    %520 = vmatpush.msra.mxu0 0.0
    %521 = vmatpush.msra.mxu0 0.0
    %522 = vmatpush.msra.mxu0 0.0
    %523 = vmatpush.msra.mxu0 0.0
    %524 = vmatpush.msra.mxu0 0.0
    %525 = vmatpush.msra.mxu0 0.0
    %526 = vmatpush.msra.mxu0 0.0
    %v527 = vand.u32 %v285, 4294901760
    %528 = vmatpush.msra.mxu0 %v527
    %v529 = vand.u32 %v288, 4294901760
    %v530 = vsub.f32 %v288, %v529
    %v531 = vand.u32 %v530, 4294901760
    %532 = vmatmul.f32.gmra.mxu0 %v531
    %v533 = vpop.f32.mrf.mxu0
    %v534 = vadd.f32 %v510, %v533
    %535 = vdwg.mxu0
    %536 = vmatpush.msra.mxu0 0.0
    %537 = vmatpush.msra.mxu0 0.0
    %538 = vmatpush.msra.mxu0 0.0
    %539 = vmatpush.msra.mxu0 0.0
    %540 = vmatpush.msra.mxu0 0.0
    %541 = vmatpush.msra.mxu0 0.0
    %542 = vmatpush.msra.mxu0 0.0
    %543 = vmatpush.msra.mxu0 0.0
    %544 = vmatpush.msra.mxu0 0.0
    %545 = vmatpush.msra.mxu0 0.0
    %546 = vmatpush.msra.mxu0 0.0
    %547 = vmatpush.msra.mxu0 0.0
    %548 = vmatpush.msra.mxu0 0.0
    %549 = vmatpush.msra.mxu0 0.0
    %550 = vmatpush.msra.mxu0 0.0
    %v551 = vand.u32 %v285, 4294901760
    %v552 = vsub.f32 %v285, %v551
    %v553 = vand.u32 %v552, 4294901760
    %554 = vmatpush.msra.mxu0 %v553
    %v555 = vand.u32 %v288, 4294901760
    %556 = vmatmul.f32.gmra.mxu0 %v555
    %v557 = vpop.f32.mrf.mxu0
    %v558 = vadd.f32 %v534, %v557
    %559 = vdwg.mxu0
    %560 = vmatpush.msra.mxu0 0.0
    %561 = vmatpush.msra.mxu0 0.0
    %562 = vmatpush.msra.mxu0 0.0
    %563 = vmatpush.msra.mxu0 0.0
    %564 = vmatpush.msra.mxu0 0.0
    %565 = vmatpush.msra.mxu0 0.0
    %566 = vmatpush.msra.mxu0 0.0
    %567 = vmatpush.msra.mxu0 0.0
    %568 = vmatpush.msra.mxu0 0.0
    %569 = vmatpush.msra.mxu0 0.0
    %570 = vmatpush.msra.mxu0 0.0
    %571 = vmatpush.msra.mxu0 0.0
    %572 = vmatpush.msra.mxu0 0.0
    %573 = vmatpush.msra.mxu0 0.0
    %574 = vmatpush.msra.mxu0 0.0
    %v575 = vand.u32 %v285, 4294901760
    %576 = vmatpush.msra.mxu0 %v575
    %v577 = vand.u32 %v288, 4294901760
    %578 = vmatmul.f32.gmra.mxu0 %v577
    %v579 = vpop.f32.mrf.mxu0
    %v580 = vadd.f32 %v558, %v579
    %581 = vdwg.mxu0
    %v582 = vadd.f32 %v434, %v580
    %583 = vadd.xlane.f32.xlu0 %v582
    %v584 = vpop.xlane.xlu0 %583
    %v585 = vmul.f32 %v434, %v434
    %v586 = vmul.f32 %v580, %v580
    %v587 = vadd.f32 %v585, %v586
    %588 = vadd.xlane.f32.xlu0 %v587
    %v589 = vpop.xlane.xlu0 %588
    %s590 = scalar_lea.vmem [#allocation2], 24
    %v591 = vld [vmem:[%s590] sm:$0xff]
    %v592 = vld [vmem:[%s590 + $0x8] sm:$0xff]
    %v593 = vmul.f32 %v591, %v75
    %v594 = vmul.f32 %v592, %v75
    %v595 = vsel %vm81, %v593, 0.0
    %v596 = vsel %vm82, %v594, 0.0
    %v597 = vld [vmem:[%s590 + $0x10] sm:$0xff]
    %v598 = vmul.f32 %v591, %v90
    %v599 = vmul.f32 %v592, %v90
    %v600 = vmul.f32 %v597, %v90
    %604 = vrot.lane.b32.xlu0 %v598, 127
    %v605 = vpop.permute.xlu0 %604
    %606 = vrot.lane.b32.xlu0 %v599, 127
    %v607 = vpop.permute.xlu0 %606
    %608 = vrot.lane.b32.xlu0 %v600, 127
    %v609 = vpop.permute.xlu0 %608
    %v610 = vsel %vm104, %v605, %v607
    %v611 = vsel %vm104, %v607, %v609
    %v614 = vadd.f32 %v595, %v610
    %v615 = vadd.f32 %v596, %v611
    %v616 = vmul.f32 %v591, %v113
    %v617 = vmul.f32 %v592, %v113
    %v618 = vmul.f32 %v597, %v113
    %622 = vrot.lane.b32.xlu0 %v616, 126
    %v623 = vpop.permute.xlu0 %622
    %624 = vrot.lane.b32.xlu0 %v617, 126
    %v625 = vpop.permute.xlu0 %624
    %626 = vrot.lane.b32.xlu0 %v618, 126
    %v627 = vpop.permute.xlu0 %626
    %v628 = vsel %vm131, %v623, %v625
    %v629 = vsel %vm131, %v625, %v627
    %v632 = vsel %vm120, %v628, 0.0
    %v633 = vsel %vm121, %v629, 0.0
    %v634 = vadd.f32 %v614, %v632
    %v635 = vadd.f32 %v615, %v633
    %v636 = vmul.f32 %v591, %v142
    %v637 = vmul.f32 %v592, %v142
    %v638 = vmul.f32 %v597, %v142
    %642 = vrot.lane.b32.xlu0 %v636, 112
    %v643 = vpop.permute.xlu0 %642
    %644 = vrot.lane.b32.xlu0 %v637, 112
    %v645 = vpop.permute.xlu0 %644
    %646 = vrot.lane.b32.xlu0 %v638, 112
    %v647 = vpop.permute.xlu0 %646
    %v648 = vsel %vm156, %v643, %v645
    %v649 = vsel %vm156, %v645, %v647
    %v652 = vsel %vm81, %v648, 0.0
    %v653 = vsel %vm82, %v649, 0.0
    %v654 = vadd.f32 %v634, %v652
    %v655 = vadd.f32 %v635, %v653
    %v656 = vmul.f32 %v591, %v167
    %v657 = vmul.f32 %v592, %v167
    %v658 = vmul.f32 %v597, %v167
    %662 = vrot.lane.b32.xlu0 %v656, 111
    %v663 = vpop.permute.xlu0 %662
    %664 = vrot.lane.b32.xlu0 %v657, 111
    %v665 = vpop.permute.xlu0 %664
    %666 = vrot.lane.b32.xlu0 %v658, 111
    %v667 = vpop.permute.xlu0 %666
    %v668 = vsel %vm181, %v663, %v665
    %v669 = vsel %vm181, %v665, %v667
    %v672 = vadd.f32 %v654, %v668
    %v673 = vadd.f32 %v655, %v669
    %v674 = vmul.f32 %v591, %v190
    %v675 = vmul.f32 %v592, %v190
    %v676 = vmul.f32 %v597, %v190
    %680 = vrot.lane.b32.xlu0 %v674, 110
    %v681 = vpop.permute.xlu0 %680
    %682 = vrot.lane.b32.xlu0 %v675, 110
    %v683 = vpop.permute.xlu0 %682
    %684 = vrot.lane.b32.xlu0 %v676, 110
    %v685 = vpop.permute.xlu0 %684
    %v686 = vsel %vm204, %v681, %v683
    %v687 = vsel %vm204, %v683, %v685
    %v690 = vsel %vm120, %v686, 0.0
    %v691 = vsel %vm121, %v687, 0.0
    %v692 = vadd.f32 %v672, %v690
    %v693 = vadd.f32 %v673, %v691
    %v694 = vmul.f32 %v591, %v215
    %v695 = vmul.f32 %v592, %v215
    %v696 = vmul.f32 %v597, %v215
    %700 = vrot.lane.b32.xlu0 %v694, 96
    %v701 = vpop.permute.xlu0 %700
    %702 = vrot.lane.b32.xlu0 %v695, 96
    %v703 = vpop.permute.xlu0 %702
    %704 = vrot.lane.b32.xlu0 %v696, 96
    %v705 = vpop.permute.xlu0 %704
    %v706 = vsel %vm229, %v701, %v703
    %v707 = vsel %vm229, %v703, %v705
    %v710 = vsel %vm81, %v706, 0.0
    %v711 = vsel %vm82, %v707, 0.0
    %v712 = vadd.f32 %v692, %v710
    %v713 = vadd.f32 %v693, %v711
    %v714 = vmul.f32 %v591, %v240
    %v715 = vmul.f32 %v592, %v240
    %v716 = vmul.f32 %v597, %v240
    %720 = vrot.lane.b32.xlu0 %v714, 95
    %v721 = vpop.permute.xlu0 %720
    %722 = vrot.lane.b32.xlu0 %v715, 95
    %v723 = vpop.permute.xlu0 %722
    %724 = vrot.lane.b32.xlu0 %v716, 95
    %v725 = vpop.permute.xlu0 %724
    %v726 = vsel %vm254, %v721, %v723
    %v727 = vsel %vm254, %v723, %v725
    %v730 = vadd.f32 %v712, %v726
    %v731 = vadd.f32 %v713, %v727
    %v732 = vmul.f32 %v591, %v263
    %v733 = vmul.f32 %v592, %v263
    %v734 = vmul.f32 %v597, %v263
    %738 = vrot.lane.b32.xlu0 %v732, 94
    %v739 = vpop.permute.xlu0 %738
    %740 = vrot.lane.b32.xlu0 %v733, 94
    %v741 = vpop.permute.xlu0 %740
    %742 = vrot.lane.b32.xlu0 %v734, 94
    %v743 = vpop.permute.xlu0 %742
    %v744 = vsel %vm277, %v739, %v741
    %v745 = vsel %vm277, %v741, %v743
    %v748 = vsel %vm120, %v744, 0.0
    %v749 = vsel %vm121, %v745, 0.0
    %v750 = vadd.f32 %v730, %v748
    %v751 = vadd.f32 %v731, %v749
    %752 = vmatpush.msra.mxu0 0.0
    %753 = vmatpush.msra.mxu0 0.0
    %754 = vmatpush.msra.mxu0 0.0
    %755 = vmatpush.msra.mxu0 0.0
    %756 = vmatpush.msra.mxu0 0.0
    %757 = vmatpush.msra.mxu0 0.0
    %758 = vmatpush.msra.mxu0 0.0
    %759 = vmatpush.msra.mxu0 0.0
    %760 = vmatpush.msra.mxu0 0.0
    %761 = vmatpush.msra.mxu0 0.0
    %762 = vmatpush.msra.mxu0 0.0
    %763 = vmatpush.msra.mxu0 0.0
    %764 = vmatpush.msra.mxu0 0.0
    %765 = vmatpush.msra.mxu0 0.0
    %766 = vmatpush.msra.mxu0 0.0
    %v767 = vand.u32 %v750, 4294901760
    %768 = vmatpush.msra.mxu0 %v767
    %v769 = vand.u32 %v288, 4294901760
    %v770 = vsub.f32 %v288, %v769
    %v771 = vand.u32 %v770, 4294901760
    %v772 = vsub.f32 %v770, %v771
    %v773 = vand.u32 %v772, 4294901760
    %774 = vmatmul.f32.gmra.mxu0 %v773
    %v775 = vpop.f32.mrf.mxu0
    %v776 = vadd.f32 0.0, %v775
    %777 = vdwg.mxu0
    %778 = vmatpush.msra.mxu0 0.0
    %779 = vmatpush.msra.mxu0 0.0
    %780 = vmatpush.msra.mxu0 0.0
    %781 = vmatpush.msra.mxu0 0.0
    %782 = vmatpush.msra.mxu0 0.0
    %783 = vmatpush.msra.mxu0 0.0
    %784 = vmatpush.msra.mxu0 0.0
    %785 = vmatpush.msra.mxu0 0.0
    %786 = vmatpush.msra.mxu0 0.0
    %787 = vmatpush.msra.mxu0 0.0
    %788 = vmatpush.msra.mxu0 0.0
    %789 = vmatpush.msra.mxu0 0.0
    %790 = vmatpush.msra.mxu0 0.0
    %791 = vmatpush.msra.mxu0 0.0
    %792 = vmatpush.msra.mxu0 0.0
    %v793 = vand.u32 %v750, 4294901760
    %v794 = vsub.f32 %v750, %v793
    %v795 = vand.u32 %v794, 4294901760
    %v796 = vsub.f32 %v794, %v795
    %v797 = vand.u32 %v796, 4294901760
    %798 = vmatpush.msra.mxu0 %v797
    %v799 = vand.u32 %v288, 4294901760
    %800 = vmatmul.f32.gmra.mxu0 %v799
    %v801 = vpop.f32.mrf.mxu0
    %v802 = vadd.f32 %v776, %v801
    %803 = vdwg.mxu0
    %804 = vmatpush.msra.mxu0 0.0
    %805 = vmatpush.msra.mxu0 0.0
    %806 = vmatpush.msra.mxu0 0.0
    %807 = vmatpush.msra.mxu0 0.0
    %808 = vmatpush.msra.mxu0 0.0
    %809 = vmatpush.msra.mxu0 0.0
    %810 = vmatpush.msra.mxu0 0.0
    %811 = vmatpush.msra.mxu0 0.0
    %812 = vmatpush.msra.mxu0 0.0
    %813 = vmatpush.msra.mxu0 0.0
    %814 = vmatpush.msra.mxu0 0.0
    %815 = vmatpush.msra.mxu0 0.0
    %816 = vmatpush.msra.mxu0 0.0
    %817 = vmatpush.msra.mxu0 0.0
    %818 = vmatpush.msra.mxu0 0.0
    %v819 = vand.u32 %v750, 4294901760
    %v820 = vsub.f32 %v750, %v819
    %821 = vmatpush.msra.mxu0 %v820
    %v822 = vand.u32 %v288, 4294901760
    %v823 = vsub.f32 %v288, %v822
    %824 = vmatmul.f32.gmra.mxu0 %v823
    %v825 = vpop.f32.mrf.mxu0
    %v826 = vadd.f32 %v802, %v825
    %827 = vdwg.mxu0
    %828 = vmatpush.msra.mxu0 0.0
    %829 = vmatpush.msra.mxu0 0.0
    %830 = vmatpush.msra.mxu0 0.0
    %831 = vmatpush.msra.mxu0 0.0
    %832 = vmatpush.msra.mxu0 0.0
    %833 = vmatpush.msra.mxu0 0.0
    %834 = vmatpush.msra.mxu0 0.0
    %835 = vmatpush.msra.mxu0 0.0
    %836 = vmatpush.msra.mxu0 0.0
    %837 = vmatpush.msra.mxu0 0.0
    %838 = vmatpush.msra.mxu0 0.0
    %839 = vmatpush.msra.mxu0 0.0
    %840 = vmatpush.msra.mxu0 0.0
    %841 = vmatpush.msra.mxu0 0.0
    %842 = vmatpush.msra.mxu0 0.0
    %v843 = vand.u32 %v750, 4294901760
    %844 = vmatpush.msra.mxu0 %v843
    %v845 = vand.u32 %v288, 4294901760
    %v846 = vsub.f32 %v288, %v845
    %v847 = vand.u32 %v846, 4294901760
    %848 = vmatmul.f32.gmra.mxu0 %v847
    %v849 = vpop.f32.mrf.mxu0
    %v850 = vadd.f32 %v826, %v849
    %851 = vdwg.mxu0
    %852 = vmatpush.msra.mxu0 0.0
    %853 = vmatpush.msra.mxu0 0.0
    %854 = vmatpush.msra.mxu0 0.0
    %855 = vmatpush.msra.mxu0 0.0
    %856 = vmatpush.msra.mxu0 0.0
    %857 = vmatpush.msra.mxu0 0.0
    %858 = vmatpush.msra.mxu0 0.0
    %859 = vmatpush.msra.mxu0 0.0
    %860 = vmatpush.msra.mxu0 0.0
    %861 = vmatpush.msra.mxu0 0.0
    %862 = vmatpush.msra.mxu0 0.0
    %863 = vmatpush.msra.mxu0 0.0
    %864 = vmatpush.msra.mxu0 0.0
    %865 = vmatpush.msra.mxu0 0.0
    %866 = vmatpush.msra.mxu0 0.0
    %v867 = vand.u32 %v750, 4294901760
    %v868 = vsub.f32 %v750, %v867
    %v869 = vand.u32 %v868, 4294901760
    %870 = vmatpush.msra.mxu0 %v869
    %v871 = vand.u32 %v288, 4294901760
    %872 = vmatmul.f32.gmra.mxu0 %v871
    %v873 = vpop.f32.mrf.mxu0
    %v874 = vadd.f32 %v850, %v873
    %875 = vdwg.mxu0
    %876 = vmatpush.msra.mxu0 0.0
    %877 = vmatpush.msra.mxu0 0.0
    %878 = vmatpush.msra.mxu0 0.0
    %879 = vmatpush.msra.mxu0 0.0
    %880 = vmatpush.msra.mxu0 0.0
    %881 = vmatpush.msra.mxu0 0.0
    %882 = vmatpush.msra.mxu0 0.0
    %883 = vmatpush.msra.mxu0 0.0
    %884 = vmatpush.msra.mxu0 0.0
    %885 = vmatpush.msra.mxu0 0.0
    %886 = vmatpush.msra.mxu0 0.0
    %887 = vmatpush.msra.mxu0 0.0
    %888 = vmatpush.msra.mxu0 0.0
    %889 = vmatpush.msra.mxu0 0.0
    %890 = vmatpush.msra.mxu0 0.0
    %v891 = vand.u32 %v750, 4294901760
    %892 = vmatpush.msra.mxu0 %v891
    %v893 = vand.u32 %v288, 4294901760
    %894 = vmatmul.f32.gmra.mxu0 %v893
    %v895 = vpop.f32.mrf.mxu0
    %v896 = vadd.f32 %v874, %v895
    %897 = vdwg.mxu0
    %898 = vmatpush.msra.mxu0 0.0
    %899 = vmatpush.msra.mxu0 0.0
    %900 = vmatpush.msra.mxu0 0.0
    %901 = vmatpush.msra.mxu0 0.0
    %902 = vmatpush.msra.mxu0 0.0
    %903 = vmatpush.msra.mxu0 0.0
    %904 = vmatpush.msra.mxu0 0.0
    %905 = vmatpush.msra.mxu0 0.0
    %906 = vmatpush.msra.mxu0 0.0
    %907 = vmatpush.msra.mxu0 0.0
    %908 = vmatpush.msra.mxu0 0.0
    %909 = vmatpush.msra.mxu0 0.0
    %910 = vmatpush.msra.mxu0 0.0
    %911 = vmatpush.msra.mxu0 0.0
    %912 = vmatpush.msra.mxu0 0.0
    %v913 = vand.u32 %v751, 4294901760
    %914 = vmatpush.msra.mxu0 %v913
    %v915 = vand.u32 %v288, 4294901760
    %v916 = vsub.f32 %v288, %v915
    %v917 = vand.u32 %v916, 4294901760
    %v918 = vsub.f32 %v916, %v917
    %v919 = vand.u32 %v918, 4294901760
    %920 = vmatmul.f32.gmra.mxu0 %v919
    %v921 = vpop.f32.mrf.mxu0
    %v922 = vadd.f32 0.0, %v921
    %923 = vdwg.mxu0
    %924 = vmatpush.msra.mxu0 0.0
    %925 = vmatpush.msra.mxu0 0.0
    %926 = vmatpush.msra.mxu0 0.0
    %927 = vmatpush.msra.mxu0 0.0
    %928 = vmatpush.msra.mxu0 0.0
    %929 = vmatpush.msra.mxu0 0.0
    %930 = vmatpush.msra.mxu0 0.0
    %931 = vmatpush.msra.mxu0 0.0
    %932 = vmatpush.msra.mxu0 0.0
    %933 = vmatpush.msra.mxu0 0.0
    %934 = vmatpush.msra.mxu0 0.0
    %935 = vmatpush.msra.mxu0 0.0
    %936 = vmatpush.msra.mxu0 0.0
    %937 = vmatpush.msra.mxu0 0.0
    %938 = vmatpush.msra.mxu0 0.0
    %v939 = vand.u32 %v751, 4294901760
    %v940 = vsub.f32 %v751, %v939
    %v941 = vand.u32 %v940, 4294901760
    %v942 = vsub.f32 %v940, %v941
    %v943 = vand.u32 %v942, 4294901760
    %944 = vmatpush.msra.mxu0 %v943
    %v945 = vand.u32 %v288, 4294901760
    %946 = vmatmul.f32.gmra.mxu0 %v945
    %v947 = vpop.f32.mrf.mxu0
    %v948 = vadd.f32 %v922, %v947
    %949 = vdwg.mxu0
    %950 = vmatpush.msra.mxu0 0.0
    %951 = vmatpush.msra.mxu0 0.0
    %952 = vmatpush.msra.mxu0 0.0
    %953 = vmatpush.msra.mxu0 0.0
    %954 = vmatpush.msra.mxu0 0.0
    %955 = vmatpush.msra.mxu0 0.0
    %956 = vmatpush.msra.mxu0 0.0
    %957 = vmatpush.msra.mxu0 0.0
    %958 = vmatpush.msra.mxu0 0.0
    %959 = vmatpush.msra.mxu0 0.0
    %960 = vmatpush.msra.mxu0 0.0
    %961 = vmatpush.msra.mxu0 0.0
    %962 = vmatpush.msra.mxu0 0.0
    %963 = vmatpush.msra.mxu0 0.0
    %964 = vmatpush.msra.mxu0 0.0
    %v965 = vand.u32 %v751, 4294901760
    %v966 = vsub.f32 %v751, %v965
    %967 = vmatpush.msra.mxu0 %v966
    %v968 = vand.u32 %v288, 4294901760
    %v969 = vsub.f32 %v288, %v968
    %970 = vmatmul.f32.gmra.mxu0 %v969
    %v971 = vpop.f32.mrf.mxu0
    %v972 = vadd.f32 %v948, %v971
    %973 = vdwg.mxu0
    %974 = vmatpush.msra.mxu0 0.0
    %975 = vmatpush.msra.mxu0 0.0
    %976 = vmatpush.msra.mxu0 0.0
    %977 = vmatpush.msra.mxu0 0.0
    %978 = vmatpush.msra.mxu0 0.0
    %979 = vmatpush.msra.mxu0 0.0
    %980 = vmatpush.msra.mxu0 0.0
    %981 = vmatpush.msra.mxu0 0.0
    %982 = vmatpush.msra.mxu0 0.0
    %983 = vmatpush.msra.mxu0 0.0
    %984 = vmatpush.msra.mxu0 0.0
    %985 = vmatpush.msra.mxu0 0.0
    %986 = vmatpush.msra.mxu0 0.0
    %987 = vmatpush.msra.mxu0 0.0
    %988 = vmatpush.msra.mxu0 0.0
    %v989 = vand.u32 %v751, 4294901760
    %990 = vmatpush.msra.mxu0 %v989
    %v991 = vand.u32 %v288, 4294901760
    %v992 = vsub.f32 %v288, %v991
    %v993 = vand.u32 %v992, 4294901760
    %994 = vmatmul.f32.gmra.mxu0 %v993
    %v995 = vpop.f32.mrf.mxu0
    %v996 = vadd.f32 %v972, %v995
    %997 = vdwg.mxu0
    %998 = vmatpush.msra.mxu0 0.0
    %999 = vmatpush.msra.mxu0 0.0
    %1000 = vmatpush.msra.mxu0 0.0
    %1001 = vmatpush.msra.mxu0 0.0
    %1002 = vmatpush.msra.mxu0 0.0
    %1003 = vmatpush.msra.mxu0 0.0
    %1004 = vmatpush.msra.mxu0 0.0
    %1005 = vmatpush.msra.mxu0 0.0
    %1006 = vmatpush.msra.mxu0 0.0
    %1007 = vmatpush.msra.mxu0 0.0
    %1008 = vmatpush.msra.mxu0 0.0
    %1009 = vmatpush.msra.mxu0 0.0
    %1010 = vmatpush.msra.mxu0 0.0
    %1011 = vmatpush.msra.mxu0 0.0
    %1012 = vmatpush.msra.mxu0 0.0
    %v1013 = vand.u32 %v751, 4294901760
    %v1014 = vsub.f32 %v751, %v1013
    %v1015 = vand.u32 %v1014, 4294901760
    %1016 = vmatpush.msra.mxu0 %v1015
    %v1017 = vand.u32 %v288, 4294901760
    %1018 = vmatmul.f32.gmra.mxu0 %v1017
    %v1019 = vpop.f32.mrf.mxu0
    %v1020 = vadd.f32 %v996, %v1019
    %1021 = vdwg.mxu0
    %1022 = vmatpush.msra.mxu0 0.0
    %1023 = vmatpush.msra.mxu0 0.0
    %1024 = vmatpush.msra.mxu0 0.0
    %1025 = vmatpush.msra.mxu0 0.0
    %1026 = vmatpush.msra.mxu0 0.0
    %1027 = vmatpush.msra.mxu0 0.0
    %1028 = vmatpush.msra.mxu0 0.0
    %1029 = vmatpush.msra.mxu0 0.0
    %1030 = vmatpush.msra.mxu0 0.0
    %1031 = vmatpush.msra.mxu0 0.0
    %1032 = vmatpush.msra.mxu0 0.0
    %1033 = vmatpush.msra.mxu0 0.0
    %1034 = vmatpush.msra.mxu0 0.0
    %1035 = vmatpush.msra.mxu0 0.0
    %1036 = vmatpush.msra.mxu0 0.0
    %v1037 = vand.u32 %v751, 4294901760
    %1038 = vmatpush.msra.mxu0 %v1037
    %v1039 = vand.u32 %v288, 4294901760
    %1040 = vmatmul.f32.gmra.mxu0 %v1039
    %v1041 = vpop.f32.mrf.mxu0
    %v1042 = vadd.f32 %v1020, %v1041
    %1043 = vdwg.mxu0
    %v1044 = vadd.f32 %v896, %v1042
    %1045 = vadd.xlane.f32.xlu0 %v1044
    %v1046 = vpop.xlane.xlu0 %1045
    %v1047 = vmul.f32 %v896, %v896
    %v1048 = vmul.f32 %v1042, %v1042
    %v1049 = vadd.f32 %v1047, %v1048
    %1050 = vadd.xlane.f32.xlu0 %v1049
    %v1051 = vpop.xlane.xlu0 %1050
    %v1052 = vadd.f32 %v584, %v1046
    %v1053 = vadd.f32 %v589, %v1051
    %v1054 = vmul.f32 %v1052, 0.001953125
    %v1055 = vmul.f32 %v1053, 0.001953125
    %v1056 = vmul.f32 %v1054, %v1054
    %v1057 = vsub.f32 %v1055, %v1056
    %v1058 = vmax.f32 %v1057, 0.0
    %v1059 = vld [vmem:[%s3] sm:$0xff]
    %v1060 = vadd.f32 %v1058, 1e-05
    %v1061 = vrsqrt.pop %v1060
    %v1062 = vmul.f32 %v1061, %v1060
    %v1063 = vmul.f32 %v1062, %v1061
    %v1064 = vmul.f32 0.5, %v1063
    %v1065 = vsub.f32 1.5, %v1064
    %v1066 = vmul.f32 %v1061, %v1065
    %vm1067 = vweird.f32 %v1060
    %vm1068 = vweird.f32 %v1061
    %vm1069 = vmor %vm1067, %vm1068
    %v1070 = vsel %vm1069, %v1061, %v1066
    %v1071 = vmul.f32 %v1059, %v1070
    %v1072 = vld [vmem:[%s4] sm:$0xff]
    %v1073 = vmul.f32 %v1054, %v1071
    %v1074 = vsub.f32 %v1072, %v1073
    %1076 = vset.pattern.permute.xlu0 0
    %1077 = vperm.xlu0 %1076, %v1071
    %v1078 = vpop.permute.xlu0 %1077
    %v1080 = vmul.f32 %v434, %v1078
    %v1081 = vmul.f32 %v580, %v1078
    %1083 = vset.pattern.permute.xlu0 0
    %1084 = vperm.xlu0 %1083, %v1074
    %v1085 = vpop.permute.xlu0 %1084
    %v1087 = vadd.f32 %v1080, %v1085
    %v1088 = vadd.f32 %v1081, %v1085
    %v1089 = vmax.f32 %v1087, 0.0
    %v1090 = vmax.f32 %v1088, 0.0
    %1091 = vst [vmem:[#allocation5] sm:$0xff] %v1089
    %1092 = vst [vmem:[#allocation5 + $0x8] sm:$0xff] %v1090
    %v1093 = vmul.f32 %v896, %v1078
    %v1094 = vmul.f32 %v1042, %v1078
    %v1095 = vadd.f32 %v1093, %v1085
    %v1096 = vadd.f32 %v1094, %v1085
    %v1097 = vmax.f32 %v1095, 0.0
    %v1098 = vmax.f32 %v1096, 0.0
    %s1099 = scalar_lea.vmem [#allocation5], 16
    %1100 = vst [vmem:[%s1099] sm:$0xff] %v1097
    %1101 = vst [vmem:[%s1099 + $0x8] sm:$0xff] %v1098
    // Predicated region
    $region26: #{tpu_custom_call.1} parent=1 // pred_check
      _
    $region27: #{tpu_custom_call.1} parent=1 // pred_check_branch
      %1103 = sbr.rel (0) target = $region29
    $region28: #{tpu_custom_call.1} parent=1 // pred_region
      %1105 = vsyncadd [#allocation4], 0
      %s1106 = sshll.u32 [#allocation5], 4
      %s1107 = int_to_ptr.vmem [resolvable:$true] %s1106
      %s1108 = sshll.u32 %s5, 4
      %s1109 = int_to_ptr.hbm [resolvable:$true] %s1108
      %1114 = dma.vmem_to_hbm [thread:$0]  %s1107, 512, %s1109, [#allocation4], 256, 256, 16
    $region29: #{tpu_custom_call.1} parent=1 // pred_fallthru
      _
    // Predicated region
    $region30: #{tpu_custom_call.1} parent=1 // pred_check
      _
    $region31: #{tpu_custom_call.1} parent=1 // pred_check_branch
      %1116 = sbr.rel (0) target = $region33
    $region32: #{tpu_custom_call.1} parent=1 // pred_region
      %1118 = dma.done [#allocation4], 512
    $region33: #{tpu_custom_call.1} parent=1 // pred_fallthru
      _
    %1119 = vsyncpa [#allocation3], 1
    %1120 = vsyncpa [#allocation4], 1

</llo_original>
